<compile_context>
chip_gen: v5e
topology: v5e:2x2
jax: 0.10.0
libtpu: 0.0.40
codegen_flags: <defaults>
</compile_context>

<pallas_src>
import functools

import jax
import jax.numpy as jnp
from jax.experimental import pallas as pl
from jax.experimental.pallas import tpu as pltpu

EPS = 1e-5


def _bn_train(x, gamma, beta):
    # Train-mode BatchNorm on an (R, C) f32 slab: per-channel stats over rows
    # (== over (N, L)), biased variance, two-pass for numerical stability.
    mean = jnp.mean(x, axis=0, keepdims=True)
    d = x - mean
    var = jnp.mean(d * d, axis=0, keepdims=True)
    return d * jax.lax.rsqrt(var + EPS) * gamma + beta


def _block_kernel(*refs, stride, has_ds):
    out_ref = refs[-1]
    it = iter(refs[:-1])
    xc_ref = next(it)                              # centre tap x[:, ::s] (also identity)
    xodd_ref = next(it) if stride == 2 else None   # odd phase x[:, 1::2] (stride 2 only)
    mfirst_ref, mlast_ref = next(it), next(it)     # (rows, 1) boundary masks
    w1, g1, be1 = next(it), next(it), next(it)
    w2, g2, be2 = next(it), next(it), next(it)
    if has_ds:
        wd, gd, bed = next(it), next(it), next(it)

    rows = out_ref.shape[0]                        # N * L_out
    mfirst = mfirst_ref[...]                       # 0.0 where t == 0, else 1.0
    mlast = mlast_ref[...]                         # 0.0 where t == L_out-1, else 1.0

    def roll_down(v):                              # result[r] = v[r-1]  (jnp.roll(v, 1, 0))
        return pltpu.roll(v, 1, 0)

    def roll_up(v):                                # result[r] = v[r+1]  (jnp.roll(v, -1, 0))
        return pltpu.roll(v, rows - 1, 0)

    def mm(a, w):                                  # bf16 x bf16 -> f32 accumulate on the MXU
        return jnp.dot(a.astype(jnp.bfloat16), w,
                       preferred_element_type=jnp.float32)

    # ---- conv1 (k=3, pad=1, stride=s): three accumulating matmuls, one per tap.
    # Neighbour taps come from an XLU roll + per-sample boundary mask; conv bias
    # is omitted (cancels exactly under train-mode BN).
    xc = xc_ref[...]
    if stride == 1:
        left = roll_down(xc) * mfirst
        right = roll_up(xc) * mlast
    else:                                          # stride == 2: neighbours are the odd phase
        xodd = xodd_ref[...]                       # zero row appended by wrapper if L is odd
        left = roll_down(xodd) * mfirst
        right = xodd
    z1 = mm(left, w1[0]) + mm(xc, w1[1]) + mm(right, w1[2])
    y = jnp.maximum(_bn_train(z1, g1[...], be1[...]), 0.0)        # bn1 + relu (f32)

    # ---- conv2 (k=3, pad=1, stride=1): same roll + mask trick on the bn1 output.
    z2 = (mm(roll_down(y) * mfirst, w2[0]) + mm(y, w2[1])
          + mm(roll_up(y) * mlast, w2[2]))
    y2 = _bn_train(z2, g2[...], be2[...])                          # bn2

    # ---- identity path: 1x1 strided conv + BN, or plain f32 pass-through.
    ident = _bn_train(mm(xc, wd[...]), gd[...], bed[...]) if has_ds else xc
    out_ref[...] = jnp.maximum(y2 + ident, 0.0)


def basic_block_1d(x_ncl, params, stride):
    """x_ncl: (N, C_in, L) float32, PyTorch NCL layout. Returns (N, C_out, L_out)."""
    if stride not in (1, 2):
        # TODO(synk): generic stride needs per-phase tap decimation in the wrapper.
        raise NotImplementedError("BasicBlock1D kernel supports stride 1 or 2.")
    n, c_in, l_in = x_ncl.shape
    c_out = params["w1"].shape[0]
    has_ds = (stride != 1) or (c_in != c_out)
    l_out = (l_in - 1) // stride + 1
    rows = n * l_out

    # Glue (layout only, no compute): NCL -> channels-last (rows, C) slab. For
    # stride 2 the even/odd phase decimation happens here so the kernel never
    # does strided sublane slices, and no full-array jnp.pad round trip is made.
    x_nlc = jnp.transpose(x_ncl, (0, 2, 1)).astype(jnp.float32)        # (N, L, Cin)
    xc = x_nlc[:, ::stride, :].reshape(rows, c_in)                     # centre tap / identity
    acts = [xc]
    if stride == 2:
        xodd = x_nlc[:, 1::2, :]                                       # (N, floor(L/2), Cin)
        if xodd.shape[1] < l_out:                                      # L odd: append zero row
            xodd = jnp.pad(xodd, ((0, 0), (0, l_out - xodd.shape[1]), (0, 0)))
        acts.append(xodd.reshape(rows, c_in))

    # Per-row boundary masks (t == 0 / t == L_out-1 within each sample) as
    # (rows, 1) f32 columns so the kernel only does a broadcast multiply.
    pos = jnp.tile(jnp.arange(l_out, dtype=jnp.int32), n)
    mask_first = (pos != 0).astype(jnp.float32)[:, None]
    mask_last = (pos != l_out - 1).astype(jnp.float32)[:, None]

    # Weights: PyTorch (Cout, Cin, K) -> per-tap (K, Cin, Cout), bf16 MXU operands.
    # Conv biases are intentionally NOT passed (BN(x + c) == BN(x) in train mode).
    tap_w = lambda w: jnp.transpose(w, (2, 1, 0)).astype(jnp.bfloat16)
    row = lambda v: v.reshape(1, -1).astype(jnp.float32)

    args = acts + [mask_first, mask_last,
                   tap_w(params["w1"]), row(params["g1"]), row(params["be1"]),
                   tap_w(params["w2"]), row(params["g2"]), row(params["be2"])]
    if has_ds:
        args += [jnp.transpose(params["wd"][:, :, 0], (1, 0)).astype(jnp.bfloat16),
                 row(params["gd"]), row(params["bed"])]

    # Explicit scoped-VMEM budget sized from the actual buffers (re-derived per
    # call); generous headroom for f32 intermediates, floor at a safe 16 MiB.
    arg_bytes = sum(int(a.size) * a.dtype.itemsize for a in args) + rows * c_out * 4
    vmem_limit = int(min(96 * 1024 * 1024, max(16 * 1024 * 1024, 8 * arg_bytes)))

    vmem = pl.BlockSpec(memory_space=pltpu.MemorySpace.VMEM)
    out_2d = pl.pallas_call(
        functools.partial(_block_kernel, stride=stride, has_ds=has_ds),
        out_shape=jax.ShapeDtypeStruct((rows, c_out), jnp.float32),
        in_specs=[vmem] * len(args),
        out_specs=vmem,
        compiler_params=pltpu.CompilerParams(vmem_limit_bytes=vmem_limit),
    )(*args)
    return jnp.transpose(out_2d.reshape(n, l_out, c_out), (0, 2, 1))   # back to NCL


# ----------------------------- pure-JAX reference -----------------------------
def _ref_basic_block(x, p, stride):
    def conv1d(x, w, b, s, pad):
        y = jax.lax.conv_general_dilated(
            x, w, (s,), [(pad, pad)], dimension_numbers=("NCH", "OIH", "NCH"))
        return y + b[None, :, None]

    def bn(x, g, be):
        m = x.mean(axis=(0, 2), keepdims=True)
        v = ((x - m) ** 2).mean(axis=(0, 2), keepdims=True)
        return (x - m) / jnp.sqrt(v + EPS) * g[None, :, None] + be[None, :, None]

    c_out, c_in = p["w1"].shape[0], p["w1"].shape[1]
    out = jax.nn.relu(bn(conv1d(x, p["w1"], p["b1"], stride, 1), p["g1"], p["be1"]))
    out = bn(conv1d(out, p["w2"], p["b2"], 1, 1), p["g2"], p["be2"])
    if stride != 1 or c_in != c_out:
        ident = bn(conv1d(x, p["wd"], p["bd"], stride, 0), p["gd"], p["bed"])
    else:
        ident = x
    return jax.nn.relu(out + ident)


if __name__ == "__main__":
    key = jax.random.PRNGKey(0)
    ks = jax.random.split(key, 16)

    def make_params(c_in, c_out, has_ds, keys):
        p = {
            "w1": jax.random.normal(keys[0], (c_out, c_in, 3), jnp.float32) * 0.1,
            "b1": jax.random.normal(keys[1], (c_out,), jnp.float32) * 0.1,
            "g1": jnp.ones((c_out,), jnp.float32),
            "be1": jnp.zeros((c_out,), jnp.float32),
            "w2": jax.random.normal(keys[2], (c_out, c_out, 3), jnp.float32) * 0.1,
            "b2": jax.random.normal(keys[3], (c_out,), jnp.float32) * 0.1,
            "g2": jnp.ones((c_out,), jnp.float32),
            "be2": jnp.zeros((c_out,), jnp.float32),
        }
        if has_ds:
            p.update({
                "wd": jax.random.normal(keys[4], (c_out, c_in, 1), jnp.float32) * 0.1,
                "bd": jax.random.normal(keys[5], (c_out,), jnp.float32) * 0.1,
                "gd": jnp.ones((c_out,), jnp.float32),
                "bed": jnp.zeros((c_out,), jnp.float32),
            })
        return p

    # bf16 MXU operands -> compare against the f32 reference at a loosened
    # tolerance (expected quantization error, not a bug).
    TOL = 5e-2

    # Case 1: stride-2 downsample block (C_in != C_out) — a ResNet stage boundary.
    p_ds = make_params(4, 8, True, ks[:6])
    x_ds = jax.random.normal(ks[6], (2, 4, 16), jnp.float32)
    out = jax.block_until_ready(basic_block_1d(x_ds, p_ds, 2))
    ref = _ref_basic_block(x_ds, p_ds, 2)
    assert out.shape == ref.shape == (2, 8, 8)
    assert jnp.allclose(out, ref, atol=TOL, rtol=TOL), "downsample block mismatch"

    # Case 2: stride-1 identity block (C_in == C_out, pass-through residual).
    p_id = make_params(8, 8, False, ks[7:13])
    x_id = jax.random.normal(ks[13], (2, 8, 16), jnp.float32)
    out = jax.block_until_ready(basic_block_1d(x_id, p_id, 1))
    ref = _ref_basic_block(x_id, p_id, 1)
    assert out.shape == ref.shape == (2, 8, 16)
    assert jnp.allclose(out, ref, atol=TOL, rtol=TOL), "identity block mismatch"

    print("KERNEL_OK")
</pallas_src>

<mosaic_0001>
module attributes {stable_mosaic.version = 11 : i64} {
  func.func @_block_kernel(%arg0: memref<16x4xf32, #tpu.memory_space<vmem>>, %arg1: memref<16x4xf32, #tpu.memory_space<vmem>>, %arg2: memref<16x1xf32, #tpu.memory_space<vmem>>, %arg3: memref<16x1xf32, #tpu.memory_space<vmem>>, %arg4: memref<3x4x8xbf16, #tpu.memory_space<vmem>>, %arg5: memref<1x8xf32, #tpu.memory_space<vmem>>, %arg6: memref<1x8xf32, #tpu.memory_space<vmem>>, %arg7: memref<3x8x8xbf16, #tpu.memory_space<vmem>>, %arg8: memref<1x8xf32, #tpu.memory_space<vmem>>, %arg9: memref<1x8xf32, #tpu.memory_space<vmem>>, %arg10: memref<4x8xbf16, #tpu.memory_space<vmem>>, %arg11: memref<1x8xf32, #tpu.memory_space<vmem>>, %arg12: memref<1x8xf32, #tpu.memory_space<vmem>>, %arg13: memref<16x8xf32, #tpu.memory_space<vmem>>) attributes {dimension_semantics = [], scalar_prefetch = 0 : i64, scratch_operands = 0 : i64, tpu.core_type = #tpu.core_type<tc>} {
    %c0 = arith.constant 0 : index
    %c0_0 = arith.constant 0 : index
    %0 = vector.load %arg2[%c0, %c0_0] : memref<16x1xf32, #tpu.memory_space<vmem>>, vector<16x1xf32>
    %c0_1 = arith.constant 0 : index
    %c0_2 = arith.constant 0 : index
    %1 = vector.load %arg3[%c0_1, %c0_2] : memref<16x1xf32, #tpu.memory_space<vmem>>, vector<16x1xf32>
    %c0_3 = arith.constant 0 : index
    %c0_4 = arith.constant 0 : index
    %2 = vector.load %arg0[%c0_3, %c0_4] : memref<16x4xf32, #tpu.memory_space<vmem>>, vector<16x4xf32>
    %c0_5 = arith.constant 0 : index
    %c0_6 = arith.constant 0 : index
    %3 = vector.load %arg1[%c0_5, %c0_6] : memref<16x4xf32, #tpu.memory_space<vmem>>, vector<16x4xf32>
    %c1_i32 = arith.constant 1 : i32
    %4 = tpu.dynamic_rotate %3 by %c1_i32 dim 0 : vector<16x4xf32>, i32 -> vector<16x4xf32>
    %5 = vector.broadcast %0 : vector<16x1xf32> to vector<16x4xf32>
    %6 = arith.mulf %4, %5 : vector<16x4xf32>
    %c0_7 = arith.constant 0 : index
    %c0_8 = arith.constant 0 : index
    %c0_9 = arith.constant 0 : index
    %7 = vector.load %arg4[%c0_7, %c0_8, %c0_9] : memref<3x4x8xbf16, #tpu.memory_space<vmem>>, vector<1x4x8xbf16>
    %8 = vector.shape_cast %7 : vector<1x4x8xbf16> to vector<4x8xbf16>
    %9 = arith.truncf %6 : vector<16x4xf32> to vector<16x4xbf16>
    %cst = arith.constant dense<0.000000e+00> : vector<16x8xf32>
    %10 = tpu.matmul %9, %8, %cst {dimension_numbers = #tpu.dot_dimension_numbers<[1], [0], [0], [1], [0, 0, 1, 1], [], []>} : vector<16x4xbf16>, vector<4x8xbf16>, vector<16x8xf32> -> vector<16x8xf32>
    %c1 = arith.constant 1 : index
    %c0_10 = arith.constant 0 : index
    %c0_11 = arith.constant 0 : index
    %11 = vector.load %arg4[%c1, %c0_10, %c0_11] : memref<3x4x8xbf16, #tpu.memory_space<vmem>>, vector<1x4x8xbf16>
    %12 = vector.shape_cast %11 : vector<1x4x8xbf16> to vector<4x8xbf16>
    %13 = arith.truncf %2 : vector<16x4xf32> to vector<16x4xbf16>
    %cst_12 = arith.constant dense<0.000000e+00> : vector<16x8xf32>
    %14 = tpu.matmul %13, %12, %cst_12 {dimension_numbers = #tpu.dot_dimension_numbers<[1], [0], [0], [1], [0, 0, 1, 1], [], []>} : vector<16x4xbf16>, vector<4x8xbf16>, vector<16x8xf32> -> vector<16x8xf32>
    %15 = arith.addf %10, %14 : vector<16x8xf32>
    %c2 = arith.constant 2 : index
    %c0_13 = arith.constant 0 : index
    %c0_14 = arith.constant 0 : index
    %16 = vector.load %arg4[%c2, %c0_13, %c0_14] : memref<3x4x8xbf16, #tpu.memory_space<vmem>>, vector<1x4x8xbf16>
    %17 = vector.shape_cast %16 : vector<1x4x8xbf16> to vector<4x8xbf16>
    %18 = arith.truncf %3 : vector<16x4xf32> to vector<16x4xbf16>
    %cst_15 = arith.constant dense<0.000000e+00> : vector<16x8xf32>
    %19 = tpu.matmul %18, %17, %cst_15 {dimension_numbers = #tpu.dot_dimension_numbers<[1], [0], [0], [1], [0, 0, 1, 1], [], []>} : vector<16x4xbf16>, vector<4x8xbf16>, vector<16x8xf32> -> vector<16x8xf32>
    %20 = arith.addf %15, %19 : vector<16x8xf32>
    %c0_16 = arith.constant 0 : index
    %c0_17 = arith.constant 0 : index
    %21 = vector.load %arg5[%c0_16, %c0_17] : memref<1x8xf32, #tpu.memory_space<vmem>>, vector<1x8xf32>
    %c0_18 = arith.constant 0 : index
    %c0_19 = arith.constant 0 : index
    %22 = vector.load %arg6[%c0_18, %c0_19] : memref<1x8xf32, #tpu.memory_space<vmem>>, vector<1x8xf32>
    %cst_20 = arith.constant dense<0.000000e+00> : vector<8xf32>
    %23 = vector.multi_reduction <add>, %20, %cst_20 [0] : vector<16x8xf32> to vector<8xf32>
    %24 = vector.shape_cast %23 : vector<8xf32> to vector<1x8xf32>
    %cst_21 = arith.constant 1.600000e+01 : f32
    %25 = vector.broadcast %cst_21 : f32 to vector<1x8xf32>
    %26 = arith.divf %24, %25 : vector<1x8xf32>
    %27 = vector.broadcast %26 : vector<1x8xf32> to vector<16x8xf32>
    %28 = arith.subf %20, %27 : vector<16x8xf32>
    %29 = arith.mulf %28, %28 : vector<16x8xf32>
    %cst_22 = arith.constant dense<0.000000e+00> : vector<8xf32>
    %30 = vector.multi_reduction <add>, %29, %cst_22 [0] : vector<16x8xf32> to vector<8xf32>
    %31 = vector.shape_cast %30 : vector<8xf32> to vector<1x8xf32>
    %cst_23 = arith.constant 1.600000e+01 : f32
    %32 = vector.broadcast %cst_23 : f32 to vector<1x8xf32>
    %33 = arith.divf %31, %32 : vector<1x8xf32>
    %cst_24 = arith.constant 9.99999974E-6 : f32
    %34 = vector.broadcast %cst_24 : f32 to vector<1x8xf32>
    %35 = arith.addf %33, %34 : vector<1x8xf32>
    %36 = math.rsqrt %35 : vector<1x8xf32>
    %37 = vector.broadcast %36 : vector<1x8xf32> to vector<16x8xf32>
    %38 = arith.mulf %28, %37 : vector<16x8xf32>
    %39 = vector.broadcast %21 : vector<1x8xf32> to vector<16x8xf32>
    %40 = arith.mulf %38, %39 : vector<16x8xf32>
    %41 = vector.broadcast %22 : vector<1x8xf32> to vector<16x8xf32>
    %42 = arith.addf %40, %41 : vector<16x8xf32>
    %cst_25 = arith.constant 0.000000e+00 : f32
    %43 = vector.broadcast %cst_25 : f32 to vector<16x8xf32>
    %44 = arith.maximumf %42, %43 : vector<16x8xf32>
    %c1_i32_26 = arith.constant 1 : i32
    %45 = tpu.dynamic_rotate %44 by %c1_i32_26 dim 0 : vector<16x8xf32>, i32 -> vector<16x8xf32>
    %46 = vector.broadcast %0 : vector<16x1xf32> to vector<16x8xf32>
    %47 = arith.mulf %45, %46 : vector<16x8xf32>
    %c0_27 = arith.constant 0 : index
    %c0_28 = arith.constant 0 : index
    %c0_29 = arith.constant 0 : index
    %48 = vector.load %arg7[%c0_27, %c0_28, %c0_29] : memref<3x8x8xbf16, #tpu.memory_space<vmem>>, vector<1x8x8xbf16>
    %49 = vector.shape_cast %48 : vector<1x8x8xbf16> to vector<8x8xbf16>
    %50 = arith.truncf %47 : vector<16x8xf32> to vector<16x8xbf16>
    %cst_30 = arith.constant dense<0.000000e+00> : vector<16x8xf32>
    %51 = tpu.matmul %50, %49, %cst_30 {dimension_numbers = #tpu.dot_dimension_numbers<[1], [0], [0], [1], [0, 0, 1, 1], [], []>} : vector<16x8xbf16>, vector<8x8xbf16>, vector<16x8xf32> -> vector<16x8xf32>
    %c1_31 = arith.constant 1 : index
    %c0_32 = arith.constant 0 : index
    %c0_33 = arith.constant 0 : index
    %52 = vector.load %arg7[%c1_31, %c0_32, %c0_33] : memref<3x8x8xbf16, #tpu.memory_space<vmem>>, vector<1x8x8xbf16>
    %53 = vector.shape_cast %52 : vector<1x8x8xbf16> to vector<8x8xbf16>
    %54 = arith.truncf %44 : vector<16x8xf32> to vector<16x8xbf16>
    %cst_34 = arith.constant dense<0.000000e+00> : vector<16x8xf32>
    %55 = tpu.matmul %54, %53, %cst_34 {dimension_numbers = #tpu.dot_dimension_numbers<[1], [0], [0], [1], [0, 0, 1, 1], [], []>} : vector<16x8xbf16>, vector<8x8xbf16>, vector<16x8xf32> -> vector<16x8xf32>
    %56 = arith.addf %51, %55 : vector<16x8xf32>
    %c15_i32 = arith.constant 15 : i32
    %57 = tpu.dynamic_rotate %44 by %c15_i32 dim 0 : vector<16x8xf32>, i32 -> vector<16x8xf32>
    %58 = vector.broadcast %1 : vector<16x1xf32> to vector<16x8xf32>
    %59 = arith.mulf %57, %58 : vector<16x8xf32>
    %c2_35 = arith.constant 2 : index
    %c0_36 = arith.constant 0 : index
    %c0_37 = arith.constant 0 : index
    %60 = vector.load %arg7[%c2_35, %c0_36, %c0_37] : memref<3x8x8xbf16, #tpu.memory_space<vmem>>, vector<1x8x8xbf16>
    %61 = vector.shape_cast %60 : vector<1x8x8xbf16> to vector<8x8xbf16>
    %62 = arith.truncf %59 : vector<16x8xf32> to vector<16x8xbf16>
    %cst_38 = arith.constant dense<0.000000e+00> : vector<16x8xf32>
    %63 = tpu.matmul %62, %61, %cst_38 {dimension_numbers = #tpu.dot_dimension_numbers<[1], [0], [0], [1], [0, 0, 1, 1], [], []>} : vector<16x8xbf16>, vector<8x8xbf16>, vector<16x8xf32> -> vector<16x8xf32>
    %64 = arith.addf %56, %63 : vector<16x8xf32>
    %c0_39 = arith.constant 0 : index
    %c0_40 = arith.constant 0 : index
    %65 = vector.load %arg8[%c0_39, %c0_40] : memref<1x8xf32, #tpu.memory_space<vmem>>, vector<1x8xf32>
    %c0_41 = arith.constant 0 : index
    %c0_42 = arith.constant 0 : index
    %66 = vector.load %arg9[%c0_41, %c0_42] : memref<1x8xf32, #tpu.memory_space<vmem>>, vector<1x8xf32>
    %cst_43 = arith.constant dense<0.000000e+00> : vector<8xf32>
    %67 = vector.multi_reduction <add>, %64, %cst_43 [0] : vector<16x8xf32> to vector<8xf32>
    %68 = vector.shape_cast %67 : vector<8xf32> to vector<1x8xf32>
    %cst_44 = arith.constant 1.600000e+01 : f32
    %69 = vector.broadcast %cst_44 : f32 to vector<1x8xf32>
    %70 = arith.divf %68, %69 : vector<1x8xf32>
    %71 = vector.broadcast %70 : vector<1x8xf32> to vector<16x8xf32>
    %72 = arith.subf %64, %71 : vector<16x8xf32>
    %73 = arith.mulf %72, %72 : vector<16x8xf32>
    %cst_45 = arith.constant dense<0.000000e+00> : vector<8xf32>
    %74 = vector.multi_reduction <add>, %73, %cst_45 [0] : vector<16x8xf32> to vector<8xf32>
    %75 = vector.shape_cast %74 : vector<8xf32> to vector<1x8xf32>
    %cst_46 = arith.constant 1.600000e+01 : f32
    %76 = vector.broadcast %cst_46 : f32 to vector<1x8xf32>
    %77 = arith.divf %75, %76 : vector<1x8xf32>
    %cst_47 = arith.constant 9.99999974E-6 : f32
    %78 = vector.broadcast %cst_47 : f32 to vector<1x8xf32>
    %79 = arith.addf %77, %78 : vector<1x8xf32>
    %80 = math.rsqrt %79 : vector<1x8xf32>
    %81 = vector.broadcast %80 : vector<1x8xf32> to vector<16x8xf32>
    %82 = arith.mulf %72, %81 : vector<16x8xf32>
    %83 = vector.broadcast %65 : vector<1x8xf32> to vector<16x8xf32>
    %84 = arith.mulf %82, %83 : vector<16x8xf32>
    %85 = vector.broadcast %66 : vector<1x8xf32> to vector<16x8xf32>
    %86 = arith.addf %84, %85 : vector<16x8xf32>
    %c0_48 = arith.constant 0 : index
    %c0_49 = arith.constant 0 : index
    %87 = vector.load %arg10[%c0_48, %c0_49] : memref<4x8xbf16, #tpu.memory_space<vmem>>, vector<4x8xbf16>
    %88 = arith.truncf %2 : vector<16x4xf32> to vector<16x4xbf16>
    %cst_50 = arith.constant dense<0.000000e+00> : vector<16x8xf32>
    %89 = tpu.matmul %88, %87, %cst_50 {dimension_numbers = #tpu.dot_dimension_numbers<[1], [0], [0], [1], [0, 0, 1, 1], [], []>} : vector<16x4xbf16>, vector<4x8xbf16>, vector<16x8xf32> -> vector<16x8xf32>
    %c0_51 = arith.constant 0 : index
    %c0_52 = arith.constant 0 : index
    %90 = vector.load %arg11[%c0_51, %c0_52] : memref<1x8xf32, #tpu.memory_space<vmem>>, vector<1x8xf32>
    %c0_53 = arith.constant 0 : index
    %c0_54 = arith.constant 0 : index
    %91 = vector.load %arg12[%c0_53, %c0_54] : memref<1x8xf32, #tpu.memory_space<vmem>>, vector<1x8xf32>
    %cst_55 = arith.constant dense<0.000000e+00> : vector<8xf32>
    %92 = vector.multi_reduction <add>, %89, %cst_55 [0] : vector<16x8xf32> to vector<8xf32>
    %93 = vector.shape_cast %92 : vector<8xf32> to vector<1x8xf32>
    %cst_56 = arith.constant 1.600000e+01 : f32
    %94 = vector.broadcast %cst_56 : f32 to vector<1x8xf32>
    %95 = arith.divf %93, %94 : vector<1x8xf32>
    %96 = vector.broadcast %95 : vector<1x8xf32> to vector<16x8xf32>
    %97 = arith.subf %89, %96 : vector<16x8xf32>
    %98 = arith.mulf %97, %97 : vector<16x8xf32>
    %cst_57 = arith.constant dense<0.000000e+00> : vector<8xf32>
    %99 = vector.multi_reduction <add>, %98, %cst_57 [0] : vector<16x8xf32> to vector<8xf32>
    %100 = vector.shape_cast %99 : vector<8xf32> to vector<1x8xf32>
    %cst_58 = arith.constant 1.600000e+01 : f32
    %101 = vector.broadcast %cst_58 : f32 to vector<1x8xf32>
    %102 = arith.divf %100, %101 : vector<1x8xf32>
    %cst_59 = arith.constant 9.99999974E-6 : f32
    %103 = vector.broadcast %cst_59 : f32 to vector<1x8xf32>
    %104 = arith.addf %102, %103 : vector<1x8xf32>
    %105 = math.rsqrt %104 : vector<1x8xf32>
    %106 = vector.broadcast %105 : vector<1x8xf32> to vector<16x8xf32>
    %107 = arith.mulf %97, %106 : vector<16x8xf32>
    %108 = vector.broadcast %90 : vector<1x8xf32> to vector<16x8xf32>
    %109 = arith.mulf %107, %108 : vector<16x8xf32>
    %110 = vector.broadcast %91 : vector<1x8xf32> to vector<16x8xf32>
    %111 = arith.addf %109, %110 : vector<16x8xf32>
    %112 = arith.addf %86, %111 : vector<16x8xf32>
    %cst_60 = arith.constant 0.000000e+00 : f32
    %113 = vector.broadcast %cst_60 : f32 to vector<16x8xf32>
    %114 = arith.maximumf %112, %113 : vector<16x8xf32>
    %c0_61 = arith.constant 0 : index
    %c0_62 = arith.constant 0 : index
    %115 = vector.load %arg13[%c0_61, %c0_62] : memref<16x8xf32, #tpu.memory_space<vmem>>, vector<16x8xf32>
    tpu.vector_store %arg13[%c0_61, %c0_62], %114 {strides = array<i32>} : memref<16x8xf32, #tpu.memory_space<vmem>>, vector<16x8xf32>,
    return
  }
}

</mosaic_0001>

<llo_original>
// kernel: tpu_custom_call.1
$region0: #{tpu_custom_call.1}
  #allocation0 [shape = 'u32[]', space=smem, size = 0x4, offset = 0x4, fixed_abs, tag = 'smem constant byte address 0x4 - core index']
  #allocation1 [shape = 'u32[72,128]{1,0:T(1,128)}', space=vmem, size = 0x9000, scoped, tag = 'internal scratch']
  %s0 = inlined_call_operand.vmem [shape: f32[16,4], index: 0, kind: input, shape index: {}]
  %s1 = inlined_call_operand.vmem [shape: f32[16,4], index: 1, kind: input, shape index: {}]
  %s2 = inlined_call_operand.vmem [shape: f32[16,1], index: 2, kind: input, shape index: {}]
  %s3 = inlined_call_operand.vmem [shape: f32[16,1], index: 3, kind: input, shape index: {}]
  %s4 = inlined_call_operand.vmem [shape: bf16[3,4,8], index: 4, kind: input, shape index: {}]
  %s5 = inlined_call_operand.vmem [shape: f32[1,8], index: 5, kind: input, shape index: {}]
  %s6 = inlined_call_operand.vmem [shape: f32[1,8], index: 6, kind: input, shape index: {}]
  %s7 = inlined_call_operand.vmem [shape: bf16[3,8,8], index: 7, kind: input, shape index: {}]
  %s8 = inlined_call_operand.vmem [shape: f32[1,8], index: 8, kind: input, shape index: {}]
  %s9 = inlined_call_operand.vmem [shape: f32[1,8], index: 9, kind: input, shape index: {}]
  %s10 = inlined_call_operand.vmem [shape: bf16[4,8], index: 10, kind: input, shape index: {}]
  %s11 = inlined_call_operand.vmem [shape: f32[1,8], index: 11, kind: input, shape index: {}]
  %s12 = inlined_call_operand.vmem [shape: f32[1,8], index: 12, kind: input, shape index: {}]
  %s13 = inlined_call_operand.vmem [shape: f32[16,8], index: 13, kind: output, shape index: {}]
  %s14 = sld [smem:[#allocation0]]
  $region62: #{tpu_custom_call.1} parent=0
    _
  %s16 = ssub.s32 1, %s14
  %s17 = scalar_select 0, %s16, %s14
  // Predicated region
  $region2: #{tpu_custom_call.1} parent=0 // pred_check
    _
  $region3: #{tpu_custom_call.1} parent=0 // pred_check_branch
    %19 = sbr.rel (0) target = $region5
  $region4: #{tpu_custom_call.1} parent=0 // pred_region
    _
  $region5: #{tpu_custom_call.1} parent=0 // pred_fallthru
    _
  // Predicated region
  $region6: #{tpu_custom_call.1} parent=0 // pred_check
    _
  $region7: #{tpu_custom_call.1} parent=0 // pred_check_branch
    %21 = sbr.rel (0) target = $region9
  $region8: #{tpu_custom_call.1} parent=0 // pred_region
    _
  $region9: #{tpu_custom_call.1} parent=0 // pred_fallthru
    _
  // Predicated region
  $region10: #{tpu_custom_call.1} parent=0 // pred_check
    _
  $region11: #{tpu_custom_call.1} parent=0 // pred_check_branch
    %23 = sbr.rel (0) target = $region13
  $region12: #{tpu_custom_call.1} parent=0 // pred_region
    _
  $region13: #{tpu_custom_call.1} parent=0 // pred_fallthru
    _
  // Predicated region
  $region14: #{tpu_custom_call.1} parent=0 // pred_check
    _
  $region15: #{tpu_custom_call.1} parent=0 // pred_check_branch
    %25 = sbr.rel (0) target = $region17
  $region16: #{tpu_custom_call.1} parent=0 // pred_region
    _
  $region17: #{tpu_custom_call.1} parent=0 // pred_fallthru
    _
  // Predicated region
  $region18: #{tpu_custom_call.1} parent=0 // pred_check
    _
  $region19: #{tpu_custom_call.1} parent=0 // pred_check_branch
    %27 = sbr.rel (0) target = $region21
  $region20: #{tpu_custom_call.1} parent=0 // pred_region
    _
  $region21: #{tpu_custom_call.1} parent=0 // pred_fallthru
    _
  // Predicated region
  $region22: #{tpu_custom_call.1} parent=0 // pred_check
    _
  $region23: #{tpu_custom_call.1} parent=0 // pred_check_branch
    %29 = sbr.rel (0) target = $region25
  $region24: #{tpu_custom_call.1} parent=0 // pred_region
    _
  $region25: #{tpu_custom_call.1} parent=0 // pred_fallthru
    _
  // Predicated region
  $region26: #{tpu_custom_call.1} parent=0 // pred_check
    _
  $region27: #{tpu_custom_call.1} parent=0 // pred_check_branch
    %31 = sbr.rel (0) target = $region29
  $region28: #{tpu_custom_call.1} parent=0 // pred_region
    _
  $region29: #{tpu_custom_call.1} parent=0 // pred_fallthru
    _
  // Predicated region
  $region30: #{tpu_custom_call.1} parent=0 // pred_check
    _
  $region31: #{tpu_custom_call.1} parent=0 // pred_check_branch
    %33 = sbr.rel (0) target = $region33
  $region32: #{tpu_custom_call.1} parent=0 // pred_region
    _
  $region33: #{tpu_custom_call.1} parent=0 // pred_fallthru
    _
  // Predicated region
  $region34: #{tpu_custom_call.1} parent=0 // pred_check
    _
  $region35: #{tpu_custom_call.1} parent=0 // pred_check_branch
    %35 = sbr.rel (0) target = $region37
  $region36: #{tpu_custom_call.1} parent=0 // pred_region
    _
  $region37: #{tpu_custom_call.1} parent=0 // pred_fallthru
    _
  // Predicated region
  $region38: #{tpu_custom_call.1} parent=0 // pred_check
    _
  $region39: #{tpu_custom_call.1} parent=0 // pred_check_branch
    %37 = sbr.rel (0) target = $region41
  $region40: #{tpu_custom_call.1} parent=0 // pred_region
    _
  $region41: #{tpu_custom_call.1} parent=0 // pred_fallthru
    _
  // Predicated region
  $region42: #{tpu_custom_call.1} parent=0 // pred_check
    _
  $region43: #{tpu_custom_call.1} parent=0 // pred_check_branch
    %39 = sbr.rel (0) target = $region45
  $region44: #{tpu_custom_call.1} parent=0 // pred_region
    _
  $region45: #{tpu_custom_call.1} parent=0 // pred_fallthru
    _
  // Predicated region
  $region46: #{tpu_custom_call.1} parent=0 // pred_check
    _
  $region47: #{tpu_custom_call.1} parent=0 // pred_check_branch
    %41 = sbr.rel (0) target = $region49
  $region48: #{tpu_custom_call.1} parent=0 // pred_region
    _
  $region49: #{tpu_custom_call.1} parent=0 // pred_fallthru
    _
  // Predicated region
  $region50: #{tpu_custom_call.1} parent=0 // pred_check
    _
  $region51: #{tpu_custom_call.1} parent=0 // pred_check_branch
    %43 = sbr.rel (0) target = $region53
  $region52: #{tpu_custom_call.1} parent=0 // pred_region
    _
  $region53: #{tpu_custom_call.1} parent=0 // pred_fallthru
    _
  %v45 = vld [vmem:[%s2] sm:$0xff]
  %v46 = vld [vmem:[%s2 + $0x8] sm:$0xff]
  %v47 = vld [vmem:[%s3] sm:$0xff]
  %v48 = vld [vmem:[%s3 + $0x8] sm:$0xff]
  %v49 = vld [vmem:[%s0] sm:$0xff]
  %v50 = vld [vmem:[%s0 + $0x8] sm:$0xff]
  %v51 = vld [vmem:[%s1] sm:$0xff]
  %v52 = vld [vmem:[%s1 + $0x8] sm:$0xff]
  %v53 = vrot.slane %v51, 7
  %v54 = vrot.slane %v52, 7
  %v55 = vlaneseq
  %v56 = vshrl.u32 %v55, 7
  %vm57 = vcmp.lt.s32.totalorder %v56, 1
  %v58 = vsel %vm57, %v53, %v54
  %v59 = vsel %vm57, %v54, %v53
  %61 = vset.pattern.permute.xlu0 0
  %62 = vperm.xlu0 %61, %v45
  %v63 = vpop.permute.xlu0 %62
  %66 = vset.pattern.permute.xlu0 0
  %67 = vperm.xlu0 %66, %v46
  %v68 = vpop.permute.xlu0 %67
  %v70 = vmul.f32 %v59, %v63
  %v71 = vmul.f32 %v58, %v68
  %v72 = vld [vmem:[%s4] sm:$0x3]
  %v73 = vpack.c.bf16 %v71, %v70
  %s74 = scalar_lea.vmem %s4, 2
  %v75 = vld [vmem:[%s74] sm:$0x3]
  %v76 = vpack.c.bf16 %v50, %v49
  %vm77 = vcmask 31744
  %v79 = vsel %vm77, %v76, 0
  %vm81 = vcmask 1041408
  %v83 = vsel %vm81, %v75, 0
  %85 = vmatpush.bf16.msra.mxu0 0
  %86 = vmatpush.bf16.msra.mxu0 0
  %87 = vmatpush.bf16.msra.mxu0 0
  %88 = vmatpush.bf16.msra.mxu0 0
  %89 = vmatpush.bf16.msra.mxu0 0
  %90 = vmatpush.bf16.msra.mxu0 0
  %91 = vmatpush.bf16.msra.mxu0 0
  %92 = vmatpush.bf16.msra.mxu0 %v83
  %93 = vmatmul.bf16.gmra.mxu0 %v79
  %v94 = vpop.f32.mrf.mxu0
  %v95 = vadd.f32 0.0, %v94
  %v96 = vpop.f32.mrf.mxu0
  %v97 = vadd.f32 0.0, %v96
  %98 = vdwg.mxu0
  %v100 = vsel %vm77, %v73, 0
  %v103 = vsel %vm81, %v72, 0
  %105 = vmatpush.bf16.msra.mxu0 0
  %106 = vmatpush.bf16.msra.mxu0 0
  %107 = vmatpush.bf16.msra.mxu0 0
  %108 = vmatpush.bf16.msra.mxu0 0
  %109 = vmatpush.bf16.msra.mxu0 0
  %110 = vmatpush.bf16.msra.mxu0 0
  %111 = vmatpush.bf16.msra.mxu0 0
  %112 = vmatpush.bf16.msra.mxu0 %v103
  %113 = vmatmul.bf16.gmra.mxu0 %v100
  %v114 = vpop.f32.mrf.mxu0
  %v115 = vadd.f32 %v95, %v114
  %v116 = vpop.f32.mrf.mxu0
  %v117 = vadd.f32 %v97, %v116
  %118 = vdwg.mxu0
  %s119 = scalar_lea.vmem %s4, 4
  %v120 = vld [vmem:[%s119] sm:$0x3]
  %v121 = vpack.c.bf16 %v52, %v51
  %v123 = vsel %vm77, %v121, 0
  %v126 = vsel %vm81, %v120, 0
  %128 = vmatpush.bf16.msra.mxu0 0
  %129 = vmatpush.bf16.msra.mxu0 0
  %130 = vmatpush.bf16.msra.mxu0 0
  %131 = vmatpush.bf16.msra.mxu0 0
  %132 = vmatpush.bf16.msra.mxu0 0
  %133 = vmatpush.bf16.msra.mxu0 0
  %134 = vmatpush.bf16.msra.mxu0 0
  %135 = vmatpush.bf16.msra.mxu0 %v126
  %136 = vmatmul.bf16.gmra.mxu0 %v123
  %v137 = vpop.f32.mrf.mxu0
  %v138 = vadd.f32 0.0, %v137
  %v139 = vpop.f32.mrf.mxu0
  %v140 = vadd.f32 0.0, %v139
  %141 = vdwg.mxu0
  %v142 = vadd.f32 %v115, %v138
  %v143 = vadd.f32 %v117, %v140
  %v144 = vld [vmem:[%s5] sm:$0x1]
  %v145 = vld [vmem:[%s6] sm:$0x1]
  %vm146 = vcmask 64512
  %v147 = vsel %vm146, %v142, 0.0
  %v148 = vsel %vm146, %v143, 0.0
  %v149 = vadd.f32 %v147, %v148
  %v150 = vrot.slane %v149, 4
  %v151 = vadd.f32 %v149, %v150
  %v152 = vrot.slane %v151, 2
  %v153 = vadd.f32 %v151, %v152
  %v154 = vrot.slane %v153, 1
  %v155 = vadd.f32 %v153, %v154
  %v156 = vrcp.pop 16.0
  %v157 = vmul.f32 16.0, %v156
  %v158 = vsub.f32 1.0, %v157
  %v159 = vmul.f32 %v156, %v158
  %v160 = vadd.f32 %v156, %v159
  %vm161 = vweird.f32 %v156
  %v162 = vsel %vm161, %v156, %v160
  %v163 = vmul.f32 %v155, %v162
  %v164 = vsub.f32 %v142, %v163
  %v165 = vsub.f32 %v143, %v163
  %v166 = vmul.f32 %v164, %v164
  %v167 = vmul.f32 %v165, %v165
  %v168 = vsel %vm146, %v166, 0.0
  %v169 = vsel %vm146, %v167, 0.0
  %v170 = vadd.f32 %v168, %v169
  %v171 = vrot.slane %v170, 4
  %v172 = vadd.f32 %v170, %v171
  %v173 = vrot.slane %v172, 2
  %v174 = vadd.f32 %v172, %v173
  %v175 = vrot.slane %v174, 1
  %v176 = vadd.f32 %v174, %v175
  %v177 = vmul.f32 %v176, %v162
  %v178 = vadd.f32 %v177, 1e-05
  %v179 = vrsqrt.pop %v178
  %v180 = vmul.f32 %v179, %v178
  %v181 = vmul.f32 %v180, %v179
  %v182 = vmul.f32 0.5, %v181
  %v183 = vsub.f32 1.5, %v182
  %v184 = vmul.f32 %v179, %v183
  %vm185 = vweird.f32 %v178
  %vm186 = vweird.f32 %v179
  %vm187 = vmor %vm185, %vm186
  %v188 = vsel %vm187, %v179, %v184
  %v189 = vmul.f32 %v164, %v188
  %v190 = vmul.f32 %v165, %v188
  %v192 = vperm.slane %v144, 0
  %v194 = vmul.f32 %v189, %v192
  %v195 = vmul.f32 %v190, %v192
  %v197 = vperm.slane %v145, 0
  %v199 = vadd.f32 %v194, %v197
  %v200 = vadd.f32 %v195, %v197
  %v201 = vmax.f32 %v199, 0.0
  %v202 = vmax.f32 %v200, 0.0
  %v203 = vrot.slane %v201, 7
  %v204 = vrot.slane %v202, 7
  %v205 = vsel %vm57, %v203, %v204
  %v206 = vsel %vm57, %v204, %v203
  %v207 = vmul.f32 %v206, %v63
  %v208 = vmul.f32 %v205, %v68
  %v209 = vld [vmem:[%s7] sm:$0xf]
  %v210 = vpack.c.bf16 %v208, %v207
  %s211 = scalar_lea.vmem %s7, 4
  %v212 = vld [vmem:[%s211] sm:$0xf]
  %v213 = vpack.c.bf16 %v202, %v201
  %v215 = vsel %vm146, %v213, 0
  %vm217 = vcmask 1043456
  %v219 = vsel %vm217, %v212, 0
  %221 = vmatpush.bf16.msra.mxu0 0
  %222 = vmatpush.bf16.msra.mxu0 0
  %223 = vmatpush.bf16.msra.mxu0 0
  %224 = vmatpush.bf16.msra.mxu0 0
  %225 = vmatpush.bf16.msra.mxu0 0
  %226 = vmatpush.bf16.msra.mxu0 0
  %227 = vmatpush.bf16.msra.mxu0 0
  %228 = vmatpush.bf16.msra.mxu0 %v219
  %229 = vmatmul.bf16.gmra.mxu0 %v215
  %v230 = vpop.f32.mrf.mxu0
  %v231 = vadd.f32 0.0, %v230
  %v232 = vpop.f32.mrf.mxu0
  %v233 = vadd.f32 0.0, %v232
  %234 = vdwg.mxu0
  %v236 = vsel %vm146, %v210, 0
  %v239 = vsel %vm217, %v209, 0
  %241 = vmatpush.bf16.msra.mxu0 0
  %242 = vmatpush.bf16.msra.mxu0 0
  %243 = vmatpush.bf16.msra.mxu0 0
  %244 = vmatpush.bf16.msra.mxu0 0
  %245 = vmatpush.bf16.msra.mxu0 0
  %246 = vmatpush.bf16.msra.mxu0 0
  %247 = vmatpush.bf16.msra.mxu0 0
  %248 = vmatpush.bf16.msra.mxu0 %v239
  %249 = vmatmul.bf16.gmra.mxu0 %v236
  %v250 = vpop.f32.mrf.mxu0
  %v251 = vadd.f32 %v231, %v250
  %v252 = vpop.f32.mrf.mxu0
  %v253 = vadd.f32 %v233, %v252
  %254 = vdwg.mxu0
  %v255 = vrot.slane %v201, 1
  %v256 = vrot.slane %v202, 1
  %vm257 = vcmp.lt.s32.totalorder %v56, 7
  %v258 = vsel %vm257, %v255, %v256
  %v259 = vsel %vm257, %v256, %v255
  %261 = vset.pattern.permute.xlu0 0
  %262 = vperm.xlu0 %261, %v47
  %v263 = vpop.permute.xlu0 %262
  %266 = vset.pattern.permute.xlu0 0
  %267 = vperm.xlu0 %266, %v48
  %v268 = vpop.permute.xlu0 %267
  %v270 = vmul.f32 %v258, %v263
  %v271 = vmul.f32 %v259, %v268
  %s272 = scalar_lea.vmem %s7, 8
  %v273 = vld [vmem:[%s272] sm:$0xf]
  %v274 = vpack.c.bf16 %v271, %v270
  %v276 = vsel %vm146, %v274, 0
  %v279 = vsel %vm217, %v273, 0
  %281 = vmatpush.bf16.msra.mxu0 0
  %282 = vmatpush.bf16.msra.mxu0 0
  %283 = vmatpush.bf16.msra.mxu0 0
  %284 = vmatpush.bf16.msra.mxu0 0
  %285 = vmatpush.bf16.msra.mxu0 0
  %286 = vmatpush.bf16.msra.mxu0 0
  %287 = vmatpush.bf16.msra.mxu0 0
  %288 = vmatpush.bf16.msra.mxu0 %v279
  %289 = vmatmul.bf16.gmra.mxu0 %v276
  %v290 = vpop.f32.mrf.mxu0
  %v291 = vadd.f32 0.0, %v290
  %v292 = vpop.f32.mrf.mxu0
  %v293 = vadd.f32 0.0, %v292
  %294 = vdwg.mxu0
  %v295 = vadd.f32 %v251, %v291
  %v296 = vadd.f32 %v253, %v293
  %v297 = vld [vmem:[%s8] sm:$0x1]
  %v298 = vld [vmem:[%s9] sm:$0x1]
  %v299 = vsel %vm146, %v295, 0.0
  %v300 = vsel %vm146, %v296, 0.0
  %v301 = vadd.f32 %v299, %v300
  %v302 = vrot.slane %v301, 4
  %v303 = vadd.f32 %v301, %v302
  %v304 = vrot.slane %v303, 2
  %v305 = vadd.f32 %v303, %v304
  %v306 = vrot.slane %v305, 1
  %v307 = vadd.f32 %v305, %v306
  %v308 = vmul.f32 %v307, %v162
  %v309 = vsub.f32 %v295, %v308
  %v310 = vsub.f32 %v296, %v308
  %v311 = vmul.f32 %v309, %v309
  %v312 = vmul.f32 %v310, %v310
  %v313 = vsel %vm146, %v311, 0.0
  %v314 = vsel %vm146, %v312, 0.0
  %v315 = vadd.f32 %v313, %v314
  %v316 = vrot.slane %v315, 4
  %v317 = vadd.f32 %v315, %v316
  %v318 = vrot.slane %v317, 2
  %v319 = vadd.f32 %v317, %v318
  %v320 = vrot.slane %v319, 1
  %v321 = vadd.f32 %v319, %v320
  %v322 = vmul.f32 %v321, %v162
  %v323 = vadd.f32 %v322, 1e-05
  %v324 = vrsqrt.pop %v323
  %v325 = vmul.f32 %v324, %v323
  %v326 = vmul.f32 %v325, %v324
  %v327 = vmul.f32 0.5, %v326
  %v328 = vsub.f32 1.5, %v327
  %v329 = vmul.f32 %v324, %v328
  %vm330 = vweird.f32 %v323
  %vm331 = vweird.f32 %v324
  %vm332 = vmor %vm330, %vm331
  %v333 = vsel %vm332, %v324, %v329
  %v334 = vmul.f32 %v309, %v333
  %v335 = vmul.f32 %v310, %v333
  %v337 = vperm.slane %v297, 0
  %v339 = vmul.f32 %v334, %v337
  %v340 = vmul.f32 %v335, %v337
  %v342 = vperm.slane %v298, 0
  %v344 = vadd.f32 %v339, %v342
  %v345 = vadd.f32 %v340, %v342
  %v346 = vld [vmem:[%s10] sm:$0x3]
  %v348 = vsel %vm81, %v346, 0
  %350 = vmatpush.bf16.msra.mxu0 0
  %351 = vmatpush.bf16.msra.mxu0 0
  %352 = vmatpush.bf16.msra.mxu0 0
  %353 = vmatpush.bf16.msra.mxu0 0
  %354 = vmatpush.bf16.msra.mxu0 0
  %355 = vmatpush.bf16.msra.mxu0 0
  %356 = vmatpush.bf16.msra.mxu0 0
  %357 = vmatpush.bf16.msra.mxu0 %v348
  %358 = vmatmul.bf16.gmra.mxu0 %v79
  %v359 = vpop.f32.mrf.mxu0
  %v360 = vadd.f32 0.0, %v359
  %v361 = vpop.f32.mrf.mxu0
  %v362 = vadd.f32 0.0, %v361
  %363 = vdwg.mxu0
  %v364 = vld [vmem:[%s11] sm:$0x1]
  %v365 = vld [vmem:[%s12] sm:$0x1]
  %v366 = vsel %vm146, %v360, 0.0
  %v367 = vsel %vm146, %v362, 0.0
  %v368 = vadd.f32 %v366, %v367
  %v369 = vrot.slane %v368, 4
  %v370 = vadd.f32 %v368, %v369
  %v371 = vrot.slane %v370, 2
  %v372 = vadd.f32 %v370, %v371
  %v373 = vrot.slane %v372, 1
  %v374 = vadd.f32 %v372, %v373
  %v375 = vmul.f32 %v374, %v162
  %v376 = vsub.f32 %v360, %v375
  %v377 = vsub.f32 %v362, %v375
  %v378 = vmul.f32 %v376, %v376
  %v379 = vmul.f32 %v377, %v377
  %v380 = vsel %vm146, %v378, 0.0
  %v381 = vsel %vm146, %v379, 0.0
  %v382 = vadd.f32 %v380, %v381
  %v383 = vrot.slane %v382, 4
  %v384 = vadd.f32 %v382, %v383
  %v385 = vrot.slane %v384, 2
  %v386 = vadd.f32 %v384, %v385
  %v387 = vrot.slane %v386, 1
  %v388 = vadd.f32 %v386, %v387
  %v389 = vmul.f32 %v388, %v162
  %v390 = vadd.f32 %v389, 1e-05
  %v391 = vrsqrt.pop %v390
  %v392 = vmul.f32 %v391, %v390
  %v393 = vmul.f32 %v392, %v391
  %v394 = vmul.f32 0.5, %v393
  %v395 = vsub.f32 1.5, %v394
  %v396 = vmul.f32 %v391, %v395
  %vm397 = vweird.f32 %v390
  %vm398 = vweird.f32 %v391
  %vm399 = vmor %vm397, %vm398
  %v400 = vsel %vm399, %v391, %v396
  %v401 = vmul.f32 %v376, %v400
  %v402 = vmul.f32 %v377, %v400
  %v404 = vperm.slane %v364, 0
  %v406 = vmul.f32 %v401, %v404
  %v407 = vmul.f32 %v402, %v404
  %v409 = vperm.slane %v365, 0
  %v411 = vadd.f32 %v406, %v409
  %v412 = vadd.f32 %v407, %v409
  %v413 = vadd.f32 %v344, %v411
  %v414 = vadd.f32 %v345, %v412
  %v415 = vmax.f32 %v413, 0.0
  %v416 = vmax.f32 %v414, 0.0
  %417 = vst.msk [vmem:[%s13] sm:$0xff] %vm146, %v415
  %418 = vst.msk [vmem:[%s13 + $0x8] sm:$0xff] %vm146, %v416
  // Predicated region
  $region54: #{tpu_custom_call.1} parent=0 // pred_check
    _
  $region55: #{tpu_custom_call.1} parent=0 // pred_check_branch
    %420 = sbr.rel (0) target = $region57
  $region56: #{tpu_custom_call.1} parent=0 // pred_region
    _
  $region57: #{tpu_custom_call.1} parent=0 // pred_fallthru
    _
  // Predicated region
  $region58: #{tpu_custom_call.1} parent=0 // pred_check
    _
  $region59: #{tpu_custom_call.1} parent=0 // pred_check_branch
    %422 = sbr.rel (0) target = $region61
  $region60: #{tpu_custom_call.1} parent=0 // pred_region
    _
  $region61: #{tpu_custom_call.1} parent=0 // pred_fallthru
    _

</llo_original>
